<compile_context>
chip_gen: v7x
topology: tpu7x:2x2x1
jax: 0.10.0
libtpu: 0.0.40
codegen_flags: <defaults>
</compile_context>

<pallas_src>
import functools

import jax
import jax.numpy as jnp
from jax.experimental import pallas as pl
from jax.experimental.pallas import tpu as pltpu


_VMEM_LIMIT_BYTES = 32 * 1024 * 1024    # safe on v5e/v6e/v7x (>= scoped default)
_VMEM_BLOCK_BUDGET = 20 * 1024 * 1024   # headroom under the scoped limit


def _hbm_block_target_bytes():
    # ~2 MiB logits blocks already hide the ~0.35us per-step overhead on
    # v5e/v6e; v7x (higher HBM BW, 64 MiB physical VMEM) prefers ~4 MiB.
    try:
        vmem_phys = int(getattr(pltpu.get_tpu_info(), "vmem_capacity_bytes", 0) or 0)
        if 0 < vmem_phys <= (64 << 20):     # v7x-class part
            return 4 << 20
    except Exception:
        pass
    return 2 << 20


def _choose_tile_m(hw, c, x_itemsize):
    """Spatial (lane) tile width: full extent if <=128, else 128 * 2**k."""
    if hw <= 128:
        return hw
    # VMEM accounting: the class (sublane) axis pads to 8 (f32) / 16 (bf16) /
    # 32 (int8) rows; logits and target blocks are each double-buffered.
    sublane = {4: 8, 2: 16, 1: 32}.get(x_itemsize, 8)
    c_pad = -(-c // sublane) * sublane
    hbm_target = _hbm_block_target_bytes()

    def fits(t):
        x_vmem = c_pad * t * x_itemsize      # sublane-padded logits block
        t_vmem = 8 * t * 4                   # target block (<= 1 word per lane)
        return (2 * (x_vmem + t_vmem) <= _VMEM_BLOCK_BUDGET
                and c * x_itemsize * t <= hbm_target)

    t = 128
    while t * 2 <= hw and fits(t * 2):
        t *= 2
    return t


def _focal_loss_kernel(x_ref, t_ref, out_ref, *, gamma, hw, tile_m):
    j = pl.program_id(1)                        # spatial-tile (reduction) index

    @pl.when(j == 0)
    def _():
        out_ref[...] = jnp.zeros_like(out_ref)

    x = x_ref[0].astype(jnp.float32)            # (C, TM): classes x spatial
    tgt = t_ref[0].astype(jnp.int32)            # (1, TM); upcast in vregs

    # ---- log-softmax over the class (sublane) axis: one exp per element ----
    m = jnp.max(x, axis=0, keepdims=True)       # (1, TM)
    z = x - m                                   # (C, TM)
    ez = jnp.exp(z)                             # (C, TM)
    sum_ez = jnp.sum(ez, axis=0, keepdims=True)  # (1, TM)

    # ---- gather target class BEFORE focal modulation (one-hot compare) ----
    cls = jax.lax.broadcasted_iota(jnp.int32, x.shape, 0)             # (C, TM)
    onehot = cls == tgt
    z_t = jnp.sum(jnp.where(onehot, z, 0.0), axis=0, keepdims=True)   # (1, TM)

    logpt_t = z_t - jnp.log(sum_ez)             # log-softmax at target, (1, TM)
    pt_t = jnp.exp(logpt_t)                     # one (1,TM) EUP exp (no ez_t path)
    d = 1.0 - pt_t

    # (1 - pt)**gamma: repeated multiply for small integer gamma (default 2).
    gamma_f = float(gamma)
    if gamma_f == 0.0:
        fpow = jnp.ones_like(d)
    elif gamma_f == int(gamma_f) and 0 < int(gamma_f) <= 8:
        fpow = d
        for _ in range(int(gamma_f) - 1):
            fpow = fpow * d
    else:
        fpow = jnp.power(jnp.maximum(d, 0.0), jnp.float32(gamma_f))  # NaN-safe

    picked = fpow * logpt_t                     # (1, TM)

    L = out_ref.shape[-1]

    def _accumulate(contrib):
        # Lane tree-reduce TM -> L (=128): cheap aligned VPU adds, no per-step
        # full-lane XLU reduce, better summation accuracy.
        acc = contrib
        w = tile_m
        while w > L:
            w //= 2
            acc = acc[:, :w] + acc[:, w:]
        out_ref[...] += acc[None]               # (1, 1, L)

    if hw % tile_m == 0:
        _accumulate(-picked)
    else:
        n_full = hw // tile_m                   # number of fully-valid tiles

        @pl.when(j < n_full)
        def _():
            _accumulate(-picked)

        @pl.when(j >= n_full)                   # tail tile only: mask stale lanes
        def _():
            lanes = jax.lax.broadcasted_iota(jnp.int32, picked.shape, 1)
            _accumulate(jnp.where(lanes < hw - j * tile_m, -picked, 0.0))


def focal_loss(logits, target, gamma=2.0):
    """logits: (N, C, H, W) float; target: (N, H, W) int in [0, C). Scalar f32."""
    N, C, H, W = logits.shape
    HW = H * W
    M = N * HW

    # Channel-first, lane-dense layout — plain (free) reshapes, no transpose.
    x3 = logits.reshape(N, C, HW)

    # Keep the target's native (narrow) dtype in HBM; only downcast 64-bit or
    # non-integer indices. The int32 upcast happens inside the kernel.
    if (not jnp.issubdtype(target.dtype, jnp.integer)
            or jnp.dtype(target.dtype).itemsize > 4):
        target = target.astype(jnp.int32)
    t3 = target.reshape(N, 1, HW)

    x_itemsize = jnp.dtype(logits.dtype).itemsize
    t_itemsize = jnp.dtype(t3.dtype).itemsize
    tile_m = _choose_tile_m(HW, C, x_itemsize)
    n_tiles = pl.cdiv(HW, tile_m)
    L = min(tile_m, 128)

    kernel = functools.partial(
        _focal_loss_kernel, gamma=float(gamma), hw=HW, tile_m=tile_m)

    cost = pl.CostEstimate(
        flops=10 * N * C * HW,
        transcendentals=N * (C + 2) * HW,
        bytes_accessed=N * C * HW * x_itemsize + N * HW * t_itemsize + N * L * 4,
    )

    partials = pl.pallas_call(
        kernel,
        out_shape=jax.ShapeDtypeStruct((N, 1, L), jnp.float32),
        grid_spec=pltpu.PrefetchScalarGridSpec(
            num_scalar_prefetch=0,
            grid=(N, n_tiles),
            in_specs=[
                pl.BlockSpec((1, C, tile_m), lambda n, j: (n, 0, j)),
                pl.BlockSpec((1, 1, tile_m), lambda n, j: (n, 0, j)),
            ],
            out_specs=pl.BlockSpec((1, 1, L), lambda n, j: (n, 0, 0)),
        ),
        compiler_params=pltpu.CompilerParams(
            dimension_semantics=("parallel", "arbitrary"),
            vmem_limit_bytes=_VMEM_LIMIT_BYTES),
        cost_estimate=cost,
    )(x3, t3)

    return jnp.sum(partials) / M


def _focal_loss_ref(logits, target, gamma=2.0):
    logpt = jax.nn.log_softmax(logits, axis=1)             # (N, C, H, W)
    pt = jnp.exp(logpt)
    logpt = jnp.power(1.0 - pt, gamma) * logpt
    picked = jnp.take_along_axis(logpt, target[:, None].astype(jnp.int32),
                                 axis=1)[:, 0]             # (N, H, W)
    return jnp.mean(-picked)


if __name__ == "__main__":
    key = jax.random.PRNGKey(0)
    kx, kt = jax.random.split(key)

    N, C, H, W = 2, 4, 16, 16
    x = jax.random.normal(kx, (N, C, H, W), dtype=jnp.float32)
    t = jax.random.randint(kt, (N, H, W), 0, C, dtype=jnp.int32)

    loss = focal_loss(x, t, gamma=2.0)
    loss = jax.block_until_ready(loss)

    ref = _focal_loss_ref(x, t, gamma=2.0)
    assert jnp.allclose(loss, ref, rtol=1e-5, atol=1e-5), (loss, ref)

    print("KERNEL_OK")
</pallas_src>

<mosaic_0001>
module attributes {stable_mosaic.version = 11 : i64} {
  func.func @_focal_loss_kernel(%arg0: i32, %arg1: i32, %arg2: memref<1x4x256xf32, #tpu.memory_space<vmem>>, %arg3: memref<1x1x256xi32, #tpu.memory_space<vmem>>, %arg4: memref<1x1x128xf32, #tpu.memory_space<vmem>>) attributes {dimension_semantics = [#tpu.dimension_semantics<parallel>, #tpu.dimension_semantics<arbitrary>], iteration_bounds = array<i64: 2, 1>, scalar_prefetch = 0 : i64, scratch_operands = 0 : i64, tpu.core_type = #tpu.core_type<tc>, window_params = [{transform_indices = @transform_0, window_bounds = array<i64: 1, 4, 256>}, {transform_indices = @transform_1, window_bounds = array<i64: 1, 1, 256>}, {transform_indices = @transform_2, window_bounds = array<i64: 1, 1, 128>}]} {
    %c0_i32 = arith.constant 0 : i32
    %0 = arith.cmpi eq, %arg1, %c0_i32 : i32
    %1 = arith.extui %0 : i1 to i32
    %c0_i32_0 = arith.constant 0 : i32
    %2 = arith.cmpi ne, %1, %c0_i32_0 : i32
    scf.if %2 {
      %cst_17 = arith.constant 0.000000e+00 : f32
      %37 = vector.broadcast %cst_17 : f32 to vector<1x1x128xf32>
      %c0_18 = arith.constant 0 : index
      %c0_19 = arith.constant 0 : index
      %c0_20 = arith.constant 0 : index
      %38 = vector.load %arg4[%c0_18, %c0_19, %c0_20] : memref<1x1x128xf32, #tpu.memory_space<vmem>>, vector<1x1x128xf32>
      tpu.vector_store %arg4[%c0_18, %c0_19, %c0_20], %37 {strides = array<i32>} : memref<1x1x128xf32, #tpu.memory_space<vmem>>, vector<1x1x128xf32>,
    } else {
    }
    %c0 = arith.constant 0 : index
    %c0_1 = arith.constant 0 : index
    %c0_2 = arith.constant 0 : index
    %3 = vector.load %arg2[%c0, %c0_1, %c0_2] : memref<1x4x256xf32, #tpu.memory_space<vmem>>, vector<1x4x256xf32>
    %4 = vector.shape_cast %3 : vector<1x4x256xf32> to vector<4x256xf32>
    %c0_3 = arith.constant 0 : index
    %c0_4 = arith.constant 0 : index
    %c0_5 = arith.constant 0 : index
    %5 = vector.load %arg3[%c0_3, %c0_4, %c0_5] : memref<1x1x256xi32, #tpu.memory_space<vmem>>, vector<1x1x256xi32>
    %6 = vector.shape_cast %5 : vector<1x1x256xi32> to vector<1x256xi32>
    %cst = arith.constant dense<0xFF800000> : vector<256xf32>
    %7 = vector.multi_reduction <maximumf>, %4, %cst [0] : vector<4x256xf32> to vector<256xf32>
    %8 = vector.shape_cast %7 : vector<256xf32> to vector<1x256xf32>
    %9 = vector.broadcast %8 : vector<1x256xf32> to vector<4x256xf32>
    %10 = arith.subf %4, %9 : vector<4x256xf32>
    %11 = math.exp %10 : vector<4x256xf32>
    %cst_6 = arith.constant dense<0.000000e+00> : vector<256xf32>
    %12 = vector.multi_reduction <add>, %11, %cst_6 [0] : vector<4x256xf32> to vector<256xf32>
    %13 = vector.shape_cast %12 : vector<256xf32> to vector<1x256xf32>
    %14 = tpu.iota {dimensions = array<i32: 0>} : vector<4x256xi32>
    %15 = vector.broadcast %6 : vector<1x256xi32> to vector<4x256xi32>
    %16 = arith.cmpi eq, %14, %15 : vector<4x256xi32>
    %cst_7 = arith.constant 0.000000e+00 : f32
    %17 = vector.broadcast %cst_7 : f32 to vector<4x256xf32>
    %18 = arith.select %16, %10, %17 : vector<4x256xi1>, vector<4x256xf32>
    %cst_8 = arith.constant dense<0.000000e+00> : vector<256xf32>
    %19 = vector.multi_reduction <add>, %18, %cst_8 [0] : vector<4x256xf32> to vector<256xf32>
    %20 = vector.shape_cast %19 : vector<256xf32> to vector<1x256xf32>
    %21 = math.log %13 : vector<1x256xf32>
    %22 = arith.subf %20, %21 : vector<1x256xf32>
    %23 = math.exp %22 : vector<1x256xf32>
    %cst_9 = arith.constant 1.000000e+00 : f32
    %24 = vector.broadcast %cst_9 : f32 to vector<1x256xf32>
    %25 = arith.subf %24, %23 : vector<1x256xf32>
    %26 = arith.mulf %25, %25 : vector<1x256xf32>
    %27 = arith.mulf %26, %22 : vector<1x256xf32>
    %cst_10 = arith.constant 0.000000e+00 : f32
    %28 = vector.broadcast %cst_10 : f32 to vector<1x256xf32>
    %29 = arith.subf %28, %27 : vector<1x256xf32>
    %30 = vector.extract_strided_slice %29 {offsets = [0, 0], sizes = [1, 128], strides = [1, 1]} : vector<1x256xf32> to vector<1x128xf32>
    %31 = vector.extract_strided_slice %29 {offsets = [0, 128], sizes = [1, 128], strides = [1, 1]} : vector<1x256xf32> to vector<1x128xf32>
    %32 = arith.addf %30, %31 : vector<1x128xf32>
    %c0_11 = arith.constant 0 : index
    %c0_12 = arith.constant 0 : index
    %c0_13 = arith.constant 0 : index
    %33 = vector.load %arg4[%c0_11, %c0_12, %c0_13] : memref<1x1x128xf32, #tpu.memory_space<vmem>>, vector<1x1x128xf32>
    %34 = vector.shape_cast %32 : vector<1x128xf32> to vector<1x1x128xf32>
    %35 = arith.addf %33, %34 : vector<1x1x128xf32>
    %c0_14 = arith.constant 0 : index
    %c0_15 = arith.constant 0 : index
    %c0_16 = arith.constant 0 : index
    %36 = vector.load %arg4[%c0_14, %c0_15, %c0_16] : memref<1x1x128xf32, #tpu.memory_space<vmem>>, vector<1x1x128xf32>
    tpu.vector_store %arg4[%c0_14, %c0_15, %c0_16], %35 {strides = array<i32>} : memref<1x1x128xf32, #tpu.memory_space<vmem>>, vector<1x1x128xf32>,
    return
  }
  func.func @transform_0(%arg0: i32, %arg1: i32) -> (i32, i32, i32) {
    %c0_i32 = arith.constant 0 : i32
    %c0_i32_0 = arith.constant 0 : i32
    return %arg0, %c0_i32, %arg1 : i32, i32, i32
  }
  func.func @transform_1(%arg0: i32, %arg1: i32) -> (i32, i32, i32) {
    %c0_i32 = arith.constant 0 : i32
    %c0_i32_0 = arith.constant 0 : i32
    return %arg0, %c0_i32, %arg1 : i32, i32, i32
  }
  func.func @transform_2(%arg0: i32, %arg1: i32) -> (i32, i32, i32) {
    %c0_i32 = arith.constant 0 : i32
    %c0_i32_0 = arith.constant 0 : i32
    %c0_i32_1 = arith.constant 0 : i32
    return %arg0, %c0_i32, %c0_i32_0 : i32, i32, i32
  }
}

</mosaic_0001>

<llo_original>
// kernel: tpu_custom_call.1
$region0: #{tpu_custom_call.1}
  #allocation0 [shape = 'u32[]', space=smem, size = 0x4, offset = 0x4, fixed_abs, tag = 'smem constant byte address 0x4 - core index']
  #allocation1 [shape = 'u32[144,128]{1,0:T(1,128)}', space=vmem, size = 0x12000, scoped, tag = 'internal scratch']
  %s0 = inlined_call_operand.hbm [shape: f32[2,4,256], index: 0, kind: input, shape index: {}]
  %s1 = inlined_call_operand.hbm [shape: s32[2,1,256], index: 1, kind: input, shape index: {}]
  %s2 = inlined_call_operand.hbm [shape: f32[2,1,128], index: 2, kind: output, shape index: {}]
  %s3 = sld [smem:[#allocation0]]
  $region53: #{tpu_custom_call.1} parent=0
    _
  %s5 = ssub.s32 1, %s3
  %s6 = scalar_select 0, %s5, %s3
  $region1: #{tpu_custom_call.1} parent=0
    #allocation2 [shape = 'u8[8192]{0}', space=vmem, size = 0x2000, scoped, tag = 'input window, operand 0']
    #allocation3 [shape = 's32[2]{0}', space=sflag, size = 0x8, scoped, tag = 'scoped memory for tpu_custom_call.1']
    #allocation4 [shape = 's32[2]{0}', space=sflag, size = 0x8, scoped, tag = 'scoped memory for tpu_custom_call.1']
    #allocation5 [shape = 'u8[2048]{0}', space=vmem, size = 0x800, scoped, tag = 'input window, operand 1']
    #allocation6 [shape = 's32[2]{0}', space=sflag, size = 0x8, scoped, tag = 'scoped memory for tpu_custom_call.1']
    #allocation7 [shape = 'u8[1024]{0}', space=vmem, size = 0x400, scoped, tag = 'output window, operand 0']
    %7 = vsyncpa [#allocation3], 0
    %s8 = scalar_lea.sflag [#allocation3], 1
    %9 = vsyncpa %s8, 0
    %10 = vsyncpa [#allocation6], 0
    %s11 = scalar_lea.sflag [#allocation6], 1
    %12 = vsyncpa %s11, 0
    %13 = vsyncpa [#allocation4], 0
    %s14 = scalar_lea.sflag [#allocation4], 1
    %15 = vsyncpa %s14, 0
    loop: start=0, step=1, limit=4
    $region2: #{tpu_custom_call.1} parent=1 // loop_pre_header
      _
    $region3: #{tpu_custom_call.1} parent=1 // loop_header
      %s17 = sphi 0, %s21
      %p18 = scmp.ge.s32.totalorder %s17, 4
      %s24 = sphi 0, %s36
      %s25 = sphi 0, %s32
      %s26 = sphi 0, %s24
      %s27 = sphi 0, %s25
      %s28 = sphi 0, %s26
      %s29 = sphi 0, %s27
      %s41 = sphi 0, %s43
      %s44 = sphi 0, %s41
      %s45 = sphi 0, %s44
      %s61 = sphi 0, %s45
      %s69 = sphi 0, %s71
      %s72 = sphi 0, %s69
      %s73 = sphi 0, %s72
      %s89 = sphi 0, %s73
      %s95 = sphi 0, %s97
      %s98 = sphi 0, %s95
      %s99 = sphi 0, %s98
      %s115 = sphi 0, %s99
    $region4: #{tpu_custom_call.1} parent=1 // loop_header_branch
      %20 = sbr.rel (%p18) target = $region8
    $region5: #{tpu_custom_call.1} parent=1 // loop_body
      %s22 = ssub.s32 %s17, 1
      %s23 = ssub.s32 %s17, 2
      %s30 = sadd.s32 1, %s25
      %p31 = scmp.ge.s32.totalorder %s30, 1
      %s32 = scalar_select %p31, 0, %s30
      %s33 = sadd.s32 1, %s24
      %s34 = scalar_select %p31, %s33, %s24
      %p35 = scmp.ge.s32.totalorder %s34, 2
      %s36 = scalar_select %p35, 0, %s34
      %s37 = ssub.s32 %s24, %s36
      %s38 = ssub.s32 %s25, %s32
      %s39 = sor.u32 %s37, %s38
      %p40 = scmp.eq.s32.totalorder %s39, 0
      %s42 = sadd.s32 %s41, 1
      %s43 = scalar_select %p40, %s41, %s42
      %p46 = pneg %p40
      %p47 = scmp.eq.s32.totalorder %s17, 1
      %p48 = por %p46, %p47
      %p49 = scmp.ne.s32.totalorder %s41, %s44
      %p50 = scmp.eq.s32.totalorder %s17, 0
      %p51 = por %p49, %p50
      %p52 = scmp.ne.s32.totalorder %s41, %s44
      %p53 = scmp.eq.s32.totalorder %s22, 1
      %p54 = por %p52, %p53
      %p55 = scmp.ne.s32.totalorder %s44, %s45
      %p56 = scmp.eq.s32.totalorder %s22, 0
      %p57 = por %p55, %p56
      %p58 = scmp.ne.s32.totalorder %s44, %s45
      %p59 = scmp.eq.s32.totalorder %s23, 1
      %p60 = por %p58, %p59
      %p62 = scmp.ne.s32.totalorder %s45, %s61
      %p63 = scmp.eq.s32.totalorder %s23, 0
      %p64 = por %p62, %p63
      %s65 = ssub.s32 %s24, %s36
      %s66 = ssub.s32 %s25, %s32
      %s67 = sor.u32 %s65, %s66
      %p68 = scmp.eq.s32.totalorder %s67, 0
      %s70 = sadd.s32 %s69, 1
      %s71 = scalar_select %p68, %s69, %s70
      %p74 = pneg %p68
      %p75 = scmp.eq.s32.totalorder %s17, 1
      %p76 = por %p74, %p75
      %p77 = scmp.ne.s32.totalorder %s69, %s72
      %p78 = scmp.eq.s32.totalorder %s17, 0
      %p79 = por %p77, %p78
      %p80 = scmp.ne.s32.totalorder %s69, %s72
      %p81 = scmp.eq.s32.totalorder %s22, 1
      %p82 = por %p80, %p81
      %p83 = scmp.ne.s32.totalorder %s72, %s73
      %p84 = scmp.eq.s32.totalorder %s22, 0
      %p85 = por %p83, %p84
      %p86 = scmp.ne.s32.totalorder %s72, %s73
      %p87 = scmp.eq.s32.totalorder %s23, 1
      %p88 = por %p86, %p87
      %p90 = scmp.ne.s32.totalorder %s73, %s89
      %p91 = scmp.eq.s32.totalorder %s23, 0
      %p92 = por %p90, %p91
      %s93 = ssub.s32 %s24, %s36
      %p94 = scmp.eq.s32.totalorder %s93, 0
      %s96 = sadd.s32 %s95, 1
      %s97 = scalar_select %p94, %s95, %s96
      %p100 = pneg %p94
      %p101 = scmp.eq.s32.totalorder %s17, 1
      %p102 = por %p100, %p101
      %p103 = scmp.ne.s32.totalorder %s95, %s98
      %p104 = scmp.eq.s32.totalorder %s17, 0
      %p105 = por %p103, %p104
      %p106 = scmp.ne.s32.totalorder %s95, %s98
      %p107 = scmp.eq.s32.totalorder %s22, 1
      %p108 = por %p106, %p107
      %p109 = scmp.ne.s32.totalorder %s98, %s99
      %p110 = scmp.eq.s32.totalorder %s22, 0
      %p111 = por %p109, %p110
      %p112 = scmp.ne.s32.totalorder %s98, %s99
      %p113 = scmp.eq.s32.totalorder %s23, 1
      %p114 = por %p112, %p113
      %p116 = scmp.ne.s32.totalorder %s99, %s115
      %p117 = scmp.eq.s32.totalorder %s23, 0
      %p118 = por %p116, %p117
      %p119 = scmp.le.s32.totalorder 1, %s17
      %p120 = scmp.lt.s32.totalorder %s17, 3
      %p121 = pnand %p119, %p120
      %p122 = pneg %p121
      // Predicated region
      $region9: #{tpu_custom_call.1} parent=5 // pred_check
        _
      $region10: #{tpu_custom_call.1} parent=5 // pred_check_branch
        %124 = sbr.rel (%p121) target = $region12
      $region11: #{tpu_custom_call.1} parent=5 // pred_region
        %s125 = ssub.s32 %s17, 1
      $region12: #{tpu_custom_call.1} parent=5 // pred_fallthru
        _
      %p126 = scmp.lt.s32.totalorder %s17, 2
      // Predicated region
      $region13: #{tpu_custom_call.1} parent=5 // pred_check
        %p127 = pneg %p126
      $region14: #{tpu_custom_call.1} parent=5 // pred_check_branch
        %129 = sbr.rel (%p127) target = $region16
      $region15: #{tpu_custom_call.1} parent=5 // pred_region
        // Predicated region
        $region17: #{tpu_custom_call.1} parent=15 // pred_check
          %p130 = pneg %p51
        $region18: #{tpu_custom_call.1} parent=15 // pred_check_branch
          %132 = sbr.rel (%p130) target = $region20
        $region19: #{tpu_custom_call.1} parent=15 // pred_region
          %s133 = sand.u32 %s41, 1
          %s134 = scalar_lea.sflag [#allocation3], %s133
          %s135 = sand.u32 %s41, 1
          %s136 = smul.addr %s135, 8
          %s137 = scalar_lea.vmem [#allocation2], %s136
          %s138 = smul.u32 2, %s25
          %s140 = ssub.s32 128, 128
          %141 = vsyncadd %s134, %s140
          %s142 = smul.addr %s24, 2
          %s143 = sadd.s32 %s138, %s142
          %s144 = smul.addr %s143, 64
          %s145 = scalar_lea.hbm %s0, %s144
          %s147 = sshll.u32 %s137, 4
          %s148 = int_to_ptr.vmem [resolvable:$true] %s147
          %150 = dma.hbm_to_vmem [thread:$0]  %s145, 128, %s148, %s134
        $region20: #{tpu_custom_call.1} parent=15 // pred_fallthru
          _
        // Predicated region
        $region21: #{tpu_custom_call.1} parent=15 // pred_check
          %p151 = pneg %p79
        $region22: #{tpu_custom_call.1} parent=15 // pred_check_branch
          %153 = sbr.rel (%p151) target = $region24
        $region23: #{tpu_custom_call.1} parent=15 // pred_region
          %s154 = sand.u32 %s69, 1
          %s155 = scalar_lea.sflag [#allocation6], %s154
          %s156 = sand.u32 %s69, 1
          %s157 = smul.addr %s156, 2
          %s158 = scalar_lea.vmem [#allocation5], %s157
          %s159 = smul.u32 2, %s25
          %s161 = ssub.s32 32, 32
          %162 = vsyncadd %s155, %s161
          %s163 = smul.addr %s24, 2
          %s164 = sadd.s32 %s159, %s163
          %s165 = smul.addr %s164, 16
          %s166 = scalar_lea.hbm %s1, %s165
          %s168 = sshll.u32 %s158, 4
          %s169 = int_to_ptr.vmem [resolvable:$true] %s168
          %171 = dma.hbm_to_vmem [thread:$0]  %s166, 32, %s169, %s155
        $region24: #{tpu_custom_call.1} parent=15 // pred_fallthru
          _
      $region16: #{tpu_custom_call.1} parent=5 // pred_fallthru
        _
      %p172 = scmp.le.s32.totalorder 1, %s17
      %p173 = scmp.lt.s32.totalorder %s17, 3
      %p174 = pnand %p172, %p173
      %p175 = pneg %p174
      // Predicated region
      $region25: #{tpu_custom_call.1} parent=5 // pred_check
        _
      $region26: #{tpu_custom_call.1} parent=5 // pred_check_branch
        %177 = sbr.rel (%p174) target = $region28
      $region27: #{tpu_custom_call.1} parent=5 // pred_region
        %s178 = ssub.s32 %s17, 1
        %s179 = sand.u32 %s44, 1
        %s180 = scalar_lea.sflag [#allocation3], %s179
        %s181 = sand.u32 %s44, 1
        %s182 = smul.addr %s181, 8
        %s183 = scalar_lea.vmem [#allocation2], %s182
        // Predicated region
        $region29: #{tpu_custom_call.1} parent=27 // pred_check
          %p184 = pneg %p57
        $region30: #{tpu_custom_call.1} parent=27 // pred_check_branch
          %186 = sbr.rel (%p184) target = $region32
        $region31: #{tpu_custom_call.1} parent=27 // pred_region
          %187 = dma.done %s180, 128
        $region32: #{tpu_custom_call.1} parent=27 // pred_fallthru
          _
        %s188 = sand.u32 %s72, 1
        %s189 = scalar_lea.sflag [#allocation6], %s188
        %s190 = sand.u32 %s72, 1
        %s191 = smul.addr %s190, 2
        %s192 = scalar_lea.vmem [#allocation5], %s191
        // Predicated region
        $region33: #{tpu_custom_call.1} parent=27 // pred_check
          %p193 = pneg %p85
        $region34: #{tpu_custom_call.1} parent=27 // pred_check_branch
          %195 = sbr.rel (%p193) target = $region36
        $region35: #{tpu_custom_call.1} parent=27 // pred_region
          %196 = dma.done %s189, 32
        $region36: #{tpu_custom_call.1} parent=27 // pred_fallthru
          _
        %s197 = sand.u32 %s44, 1
        %s198 = scalar_lea.sflag [#allocation3], %s197
        %s199 = sand.u32 %s44, 1
        %s200 = smul.addr %s199, 8
        %s201 = scalar_lea.vmem [#allocation2], %s200
        %p202 = pneg %p57
        %p203 = pneg %p54
        %s204 = sand.u32 %s72, 1
        %s205 = scalar_lea.sflag [#allocation6], %s204
        %s206 = sand.u32 %s72, 1
        %s207 = smul.addr %s206, 2
        %s208 = scalar_lea.vmem [#allocation5], %s207
        %p209 = pneg %p85
        %p210 = pneg %p82
        %p211 = pneg %p111
        %p212 = pneg %p108
        %s213 = sand.u32 %s98, 1
        %s214 = scalar_lea.sflag [#allocation4], %s213
        %s215 = sand.u32 %s98, 1
        %s216 = scalar_lea.vmem [#allocation7], %s215
        %s217 = smul.u32 2, %s27
        %s218 = smul.u32 2, %s27
        %p219 = scmp.eq.s32.totalorder %s27, 0
        // Predicated region
        $region37: #{tpu_custom_call.1} parent=27 // pred_check
          %p220 = pneg %p219
        $region38: #{tpu_custom_call.1} parent=27 // pred_check_branch
          %222 = sbr.rel (%p220) target = $region40
        $region39: #{tpu_custom_call.1} parent=27 // pred_region
          %223 = vst [vmem:[%s216] sm:$0x1] 0.0
        $region40: #{tpu_custom_call.1} parent=27 // pred_fallthru
          _
        %v224 = vld [vmem:[%s183] sm:$0xff]
        %v225 = vld [vmem:[%s192] sm:$0x3]
        %v227 = vcombine.high %v224, %v224
        %vm229 = vcmask 1043456
        %v230 = vsel %vm229, %v224, -inf
        %v231 = vrot.slane %v230, 4
        %v232 = vmax.f32 %v230, %v231
        %v233 = vrot.slane %v232, 2
        %v234 = vmax.f32 %v232, %v233
        %v235 = vrot.slane %v234, 1
        %v236 = vmax.f32 %v234, %v235
        %v237 = vsel %vm229, %v227, -inf
        %v238 = vrot.slane %v237, 4
        %v239 = vmax.f32 %v237, %v238
        %v240 = vrot.slane %v239, 2
        %v241 = vmax.f32 %v239, %v240
        %v242 = vrot.slane %v241, 1
        %v243 = vmax.f32 %v241, %v242
        %v246 = vcombine.low %v236, %v243
        %v248 = vsub.f32 %v224, %v246
        %v249 = vmul.f32 %v248, 1.442695
        %v250 = vpow.pop %v249
        %v252 = vcombine.high %v250, %v250
        %v254 = vsel %vm229, %v250, 0.0
        %v255 = vrot.slane %v254, 4
        %v256 = vadd.f32 %v254, %v255
        %v257 = vrot.slane %v256, 2
        %v258 = vadd.f32 %v256, %v257
        %v259 = vrot.slane %v258, 1
        %v260 = vadd.f32 %v258, %v259
        %v261 = vsel %vm229, %v252, 0.0
        %v262 = vrot.slane %v261, 4
        %v263 = vadd.f32 %v261, %v262
        %v264 = vrot.slane %v263, 2
        %v265 = vadd.f32 %v263, %v264
        %v266 = vrot.slane %v265, 1
        %v267 = vadd.f32 %v265, %v266
        %v268 = vlaneseq
        %v269 = vshrl.u32 %v268, 7
        %v270 = vlaneseq
        %v271 = vshrl.u32 %v270, 7
        %v272 = vsub.s32 0, %v271
        %v273 = vrot.slane %v225, %v272
        %v274 = vlaneseq
        %v275 = vshrl.u32 %v274, 7
        %v276 = vsub.s32 1, %v275
        %v277 = vrot.slane %v225, %v276
        %vm278 = vcmp.eq.s32.totalorder %v269, %v273
        %vm279 = vcmp.eq.s32.totalorder %v269, %v277
        %v281 = vcombine.high %v248, %v248
        %v283 = vsel %vm278, %v248, 0.0
        %v284 = vsel %vm279, %v281, 0.0
        %v285 = vsel %vm229, %v283, 0.0
        %v286 = vrot.slane %v285, 4
        %v287 = vadd.f32 %v285, %v286
        %v288 = vrot.slane %v287, 2
        %v289 = vadd.f32 %v287, %v288
        %v290 = vrot.slane %v289, 1
        %v291 = vadd.f32 %v289, %v290
        %v292 = vsel %vm229, %v284, 0.0
        %v293 = vrot.slane %v292, 4
        %v294 = vadd.f32 %v292, %v293
        %v295 = vrot.slane %v294, 2
        %v296 = vadd.f32 %v294, %v295
        %v297 = vrot.slane %v296, 1
        %v298 = vadd.f32 %v296, %v297
        %v299 = vlog2.pop %v260
        %v300 = vmul.f32 %v299, 0.6931472
        %v301 = vlog2.pop %v267
        %v302 = vmul.f32 %v301, 0.6931472
        %v303 = vsub.f32 %v291, %v300
        %v304 = vsub.f32 %v298, %v302
        %v305 = vmul.f32 %v303, 1.442695
        %v306 = vpow.pop %v305
        %v307 = vmul.f32 %v304, 1.442695
        %v308 = vpow.pop %v307
        %v309 = vsub.f32 1.0, %v306
        %v310 = vsub.f32 1.0, %v308
        %v311 = vmul.f32 %v309, %v309
        %v312 = vmul.f32 %v310, %v310
        %v313 = vmul.f32 %v311, %v303
        %v314 = vmul.f32 %v312, %v304
        %v315 = vsub.f32 0.0, %v313
        %v316 = vsub.f32 0.0, %v314
        %v317 = vadd.f32 %v315, %v316
        %v318 = vld [vmem:[%s216] sm:$0x1]
        %v319 = vadd.f32 %v318, %v317
        %320 = vst [vmem:[%s216] sm:$0x1] %v319
        %s321 = sand.u32 %s98, 1
        %s322 = scalar_lea.sflag [#allocation4], %s321
        %s323 = sand.u32 %s98, 1
        %s324 = scalar_lea.vmem [#allocation7], %s323
        // Predicated region
        $region41: #{tpu_custom_call.1} parent=27 // pred_check
          %p325 = pneg %p108
        $region42: #{tpu_custom_call.1} parent=27 // pred_check_branch
          %327 = sbr.rel (%p325) target = $region44
        $region43: #{tpu_custom_call.1} parent=27 // pred_region
          %s329 = ssub.s32 16, 16
          %330 = vsyncadd %s322, %s329
          %s331 = smul.addr %s26, 16
          %s332 = scalar_lea.hbm %s2, %s331
          %s334 = sshll.u32 %s324, 4
          %s335 = int_to_ptr.vmem [resolvable:$true] %s334
          %337 = dma.vmem_to_hbm [thread:$0]  %s335, 16, %s332, %s322
        $region44: #{tpu_custom_call.1} parent=27 // pred_fallthru
          _
      $region28: #{tpu_custom_call.1} parent=5 // pred_fallthru
        _
      %p338 = scmp.le.s32.totalorder 2, %s17
      // Predicated region
      $region45: #{tpu_custom_call.1} parent=5 // pred_check
        %p339 = pneg %p338
      $region46: #{tpu_custom_call.1} parent=5 // pred_check_branch
        %341 = sbr.rel (%p339) target = $region48
      $region47: #{tpu_custom_call.1} parent=5 // pred_region
        %s342 = ssub.s32 %s17, 2
        // Predicated region
        $region49: #{tpu_custom_call.1} parent=47 // pred_check
          %p343 = pneg %p114
        $region50: #{tpu_custom_call.1} parent=47 // pred_check_branch
          %345 = sbr.rel (%p343) target = $region52
        $region51: #{tpu_custom_call.1} parent=47 // pred_region
          %s346 = sand.u32 %s99, 1
          %s347 = scalar_lea.sflag [#allocation4], %s346
          %s348 = sand.u32 %s99, 1
          %s349 = scalar_lea.vmem [#allocation7], %s348
          %350 = dma.done %s347, 16
        $region52: #{tpu_custom_call.1} parent=47 // pred_fallthru
          _
      $region48: #{tpu_custom_call.1} parent=5 // pred_fallthru
        _
    $region6: #{tpu_custom_call.1} parent=1 // loop_footer
      %s21 = sadd.s32 1, %s17
    $region7: #{tpu_custom_call.1} parent=1 // loop_footer_branch
      %16 = sbr.rel target = $region3
    $region8: #{tpu_custom_call.1} parent=1 // loop_exit
      _
    %351 = vsyncpa [#allocation3], 1
    %s352 = scalar_lea.sflag [#allocation3], 1
    %353 = vsyncpa %s352, 1
    %354 = vsyncpa [#allocation6], 1
    %s355 = scalar_lea.sflag [#allocation6], 1
    %356 = vsyncpa %s355, 1
    %357 = vsyncpa [#allocation4], 1
    %s358 = scalar_lea.sflag [#allocation4], 1
    %359 = vsyncpa %s358, 1

</llo_original>
